<compile_context>
chip_gen: v7x
topology: tpu7x:2x2x1
jax: 0.10.0
libtpu: 0.0.40
codegen_flags: <defaults>
</compile_context>

<pallas_src>
import functools

import jax
import jax.numpy as jnp
import numpy as np
from jax.experimental import pallas as pl
from jax.experimental.pallas import tpu as pltpu


# ---------------------------------------------------------------------------
# Pass 1: global-average-pool + attention weights  (accumulate over HW tiles)
# ---------------------------------------------------------------------------
def pool_attn_kernel(xb_ref, scale_ref, shift_ref, wfc_ref, bfc_ref,
                     wfcs_ref, bfcs_ref, att_ref, acc_ref, *, inv_hw):
    B = scale_ref.shape[0]
    C = scale_ref.shape[2]
    t = pl.program_id(1)

    @pl.when(t == 0)
    def _():
        acc_ref[...] = jnp.zeros_like(acc_ref)

    # Reduce this HW tile to a (1, C) column sum immediately (1 live vreg
    # instead of a full (HW, C) accumulator + feas cache).
    col = jnp.zeros((1, C), jnp.float32)
    for b in range(B):                                  # B is small & static
        f = jnp.maximum(xb_ref[0, b] * scale_ref[b] + shift_ref[b], 0.0)
        col = col + jnp.sum(f, axis=0, keepdims=True)
    acc_ref[...] += col

    @pl.when(t == pl.num_programs(1) - 1)
    def _():
        fea_s = acc_ref[...] * inv_hw                   # (1, C)   GAP
        fea_z = jnp.dot(fea_s, wfc_ref[...],
                        preferred_element_type=jnp.float32) + bfc_ref[...]
        # All per-branch fcs fused into a single (1, d) @ (d, B*C) MXU push.
        logits = jnp.dot(fea_z, wfcs_ref[...],
                         preferred_element_type=jnp.float32) + bfcs_ref[...]
        # Softmax over the branch dimension (lane slices of width C).
        m = logits[:, 0:C]
        for b in range(1, B):
            m = jnp.maximum(m, logits[:, b * C:(b + 1) * C])
        e = jnp.exp(logits - jnp.concatenate([m] * B, axis=1))
        denom = e[:, 0:C]
        for b in range(1, B):
            denom = denom + e[:, b * C:(b + 1) * C]
        inv = 1.0 / denom
        att_ref[0] = (e * jnp.concatenate([inv] * B, axis=1)).astype(att_ref.dtype)


# ---------------------------------------------------------------------------
# Pass 2: recompute BN+ReLU per tile and apply attention + identity
# ---------------------------------------------------------------------------
def apply_kernel(x0_ref, xb_ref, scale_ref, shift_ref, att_ref, out_ref):
    B = scale_ref.shape[0]
    C = scale_ref.shape[2]
    att = att_ref[0]                                    # (1, B*C)
    out = x0_ref[0].astype(jnp.float32)                 # (THW, C)
    for b in range(B):
        # Recompute ReLU(BN(x)) instead of caching it: the kernel is
        # HBM/vst-bound, so the few extra VPU ops are free.
        f = jnp.maximum(xb_ref[0, b] * scale_ref[b] + shift_ref[b], 0.0)
        out = out + f * att[:, b * C:(b + 1) * C]       # (1,C) broadcast
    out_ref[0] = out.astype(out_ref.dtype)


def _pick_tile(hw, max_tile=1024):
    if hw <= max_tile:
        return hw
    for t in range(max_tile, 7, -1):
        if hw % t == 0 and t % 8 == 0:
            return t
    # TODO(synk): ragged HW (no multiple-of-8 divisor <= max_tile) falls back
    # to a single full-HW block instead of masked tiling.
    return hw


def skconv_pallas(x0, xb, scale, shift, wfc, bfc, wfcs_cat, bfcs_cat,
                  tile_hw=None):
    N, HW, C = x0.shape
    B = xb.shape[1]
    d = wfc.shape[1]
    if tile_hw is None:
        tile_hw = _pick_tile(HW)
    assert HW % tile_hw == 0, "tile_hw must divide HW"
    num_tiles = HW // tile_hw

    param_bytes = 4 * (2 * B * C + C * d + d + d * B * C + B * C)

    # ---- Pass 1: pooled stats -> attention weights, shape (N, 1, B*C) ----
    pool_cost = pl.CostEstimate(
        flops=int(N * B * HW * C * 4
                  + N * (2 * C * d + 2 * d * B * C + 6 * B * C)),
        transcendentals=int(N * B * C),
        bytes_accessed=int(4 * N * B * HW * C + param_bytes + 4 * N * B * C),
    )
    att = pl.pallas_call(
        functools.partial(pool_attn_kernel, inv_hw=1.0 / HW),
        out_shape=jax.ShapeDtypeStruct((N, 1, B * C), jnp.float32),
        grid_spec=pltpu.PrefetchScalarGridSpec(
            num_scalar_prefetch=0,
            grid=(N, num_tiles),
            in_specs=[
                pl.BlockSpec((1, B, tile_hw, C), lambda n, t: (n, 0, t, 0)),
                pl.BlockSpec((B, 1, C), lambda n, t: (0, 0, 0)),
                pl.BlockSpec((B, 1, C), lambda n, t: (0, 0, 0)),
                pl.BlockSpec((C, d), lambda n, t: (0, 0)),
                pl.BlockSpec((1, d), lambda n, t: (0, 0)),
                pl.BlockSpec((d, B * C), lambda n, t: (0, 0)),
                pl.BlockSpec((1, B * C), lambda n, t: (0, 0)),
            ],
            out_specs=pl.BlockSpec((1, 1, B * C), lambda n, t: (n, 0, 0)),
            scratch_shapes=[pltpu.VMEM((1, C), jnp.float32)],
        ),
        compiler_params=pltpu.CompilerParams(
            dimension_semantics=("parallel", "arbitrary"),
            vmem_limit_bytes=32 * 1024 * 1024),
        cost_estimate=pool_cost,
    )(xb, scale, shift, wfc, bfc, wfcs_cat, bfcs_cat)

    # ---- Pass 2: apply attention, tile over HW, fully parallel grid ----
    apply_cost = pl.CostEstimate(
        flops=int(N * HW * C * (4 * B + 1)),
        transcendentals=0,
        bytes_accessed=int(4 * N * HW * C * (B + 2)
                           + param_bytes + 4 * N * B * C),
    )
    out = pl.pallas_call(
        apply_kernel,
        out_shape=jax.ShapeDtypeStruct((N, HW, C), jnp.float32),
        grid_spec=pltpu.PrefetchScalarGridSpec(
            num_scalar_prefetch=0,
            grid=(N, num_tiles),
            in_specs=[
                pl.BlockSpec((1, tile_hw, C), lambda n, t: (n, t, 0)),
                pl.BlockSpec((1, B, tile_hw, C), lambda n, t: (n, 0, t, 0)),
                pl.BlockSpec((B, 1, C), lambda n, t: (0, 0, 0)),
                pl.BlockSpec((B, 1, C), lambda n, t: (0, 0, 0)),
                pl.BlockSpec((1, 1, B * C), lambda n, t: (n, 0, 0)),
            ],
            out_specs=pl.BlockSpec((1, tile_hw, C), lambda n, t: (n, t, 0)),
        ),
        compiler_params=pltpu.CompilerParams(
            dimension_semantics=("parallel", "parallel"),
            vmem_limit_bytes=32 * 1024 * 1024),
        cost_estimate=apply_cost,
    )(x0, xb, scale, shift, att)
    return out


def skconv_reference(X, gamma, beta, run_mean, run_var,
                     fc_w, fc_b, fcs_w, fcs_b, eps):
    """Pure-JAX mirror of the torch forward (NCHW), BN in eval mode."""
    branch = gamma.shape[0]
    feas = []
    for b in range(branch):
        x = X[b + 1]
        xn = (x - run_mean[b][None, :, None, None]) / jnp.sqrt(
            run_var[b][None, :, None, None] + eps)
        xn = xn * gamma[b][None, :, None, None] + beta[b][None, :, None, None]
        feas.append(jnp.maximum(xn, 0.0)[:, None])
    feas = jnp.concatenate(feas, axis=1)            # (N, B, C, H, W)
    fea_U = feas.sum(axis=1)
    fea_s = fea_U.mean(-1).mean(-1)                 # (N, C)
    fea_z = fea_s @ fc_w.T + fc_b                   # (N, d)
    vecs = [(fea_z @ fcs_w[b].T + fcs_b[b])[:, None] for b in range(branch)]
    att = jax.nn.softmax(jnp.concatenate(vecs, axis=1), axis=1)   # (N, B, C)
    fea_v = (feas * att[..., None, None]).sum(axis=1)
    return fea_v + X[0]


if __name__ == "__main__":
    # Module hyper-params: SKConv(features=128, M=3, r=4, L=32) -> d = 32, branch = 2
    features, M, r, L = 128, 3, 4, 32
    branch = M - 1
    d = max(features // r, L)
    N, H, W = 2, 16, 16
    HW = H * W
    eps = 1e-5

    key = jax.random.PRNGKey(0)
    keys = jax.random.split(key, 16)

    # Forward input: a list of M feature maps in PyTorch NCHW layout.
    X = [jax.random.normal(keys[i], (N, features, H, W), jnp.float32)
         for i in range(M)]

    # Deterministic parameters (shapes follow the module __init__).
    # TODO(synk): BN is implemented in inference mode with synthetic running
    # stats (training-mode batch statistics are not reproduced).
    gamma = jax.random.uniform(keys[4], (branch, features), jnp.float32, 0.5, 1.5)
    beta = jax.random.normal(keys[5], (branch, features), jnp.float32) * 0.1
    run_mean = jax.random.normal(keys[6], (branch, features), jnp.float32) * 0.1
    run_var = jax.random.uniform(keys[7], (branch, features), jnp.float32, 0.5, 1.5)

    fc_w = jax.random.normal(keys[8], (d, features), jnp.float32) * 0.05
    fc_b = jax.random.normal(keys[9], (d,), jnp.float32) * 0.05
    fcs_w = jax.random.normal(keys[10], (branch, features, d), jnp.float32) * 0.05
    fcs_b = jax.random.normal(keys[11], (branch, features), jnp.float32) * 0.05

    # ---- glue: NCHW -> (N, HW, C), fold BN into scale/shift, fuse fcs ----
    x0 = jnp.transpose(X[0], (0, 2, 3, 1)).reshape(N, HW, features)
    xb = jnp.stack(
        [jnp.transpose(X[b + 1], (0, 2, 3, 1)).reshape(N, HW, features)
         for b in range(branch)], axis=1)                       # (N, B, HW, C)
    inv_std = 1.0 / jnp.sqrt(run_var + eps)
    scale = (gamma * inv_std).reshape(branch, 1, features)
    shift = (beta - run_mean * gamma * inv_std).reshape(branch, 1, features)
    wfc = fc_w.T                                                # (C, d)
    bfc = fc_b.reshape(1, d)
    # Fused per-branch fc weights: (d, B*C) with branch-major columns.
    wfcs_cat = jnp.concatenate([fcs_w[b].T for b in range(branch)], axis=1)
    bfcs_cat = fcs_b.reshape(1, branch * features)

    # tile_hw=128 exercises the HW-tiled two-pass path (2 tiles per batch elt).
    out = skconv_pallas(x0, xb, scale, shift, wfc, bfc, wfcs_cat, bfcs_cat,
                        tile_hw=128)
    out = jax.block_until_ready(out)
    out_nchw = jnp.transpose(out.reshape(N, H, W, features), (0, 3, 1, 2))

    ref = skconv_reference(X, gamma, beta, run_mean, run_var,
                           fc_w, fc_b, fcs_w, fcs_b, eps)
    np.testing.assert_allclose(np.asarray(out_nchw), np.asarray(ref),
                               rtol=1e-4, atol=1e-4)
    print("KERNEL_OK")
</pallas_src>

<mosaic_0001>
module attributes {stable_mosaic.version = 11 : i64} {
  func.func @pool_attn_kernel(%arg0: i32, %arg1: i32, %arg2: memref<1x2x128x128xf32, #tpu.memory_space<vmem>>, %arg3: memref<2x1x128xf32, #tpu.memory_space<vmem>>, %arg4: memref<2x1x128xf32, #tpu.memory_space<vmem>>, %arg5: memref<128x32xf32, #tpu.memory_space<vmem>>, %arg6: memref<1x32xf32, #tpu.memory_space<vmem>>, %arg7: memref<32x256xf32, #tpu.memory_space<vmem>>, %arg8: memref<1x256xf32, #tpu.memory_space<vmem>>, %arg9: memref<1x1x256xf32, #tpu.memory_space<vmem>>, %arg10: memref<1x128xf32, #tpu.memory_space<vmem>>) attributes {dimension_semantics = [#tpu.dimension_semantics<parallel>, #tpu.dimension_semantics<arbitrary>], iteration_bounds = array<i64: 2, 2>, scalar_prefetch = 0 : i64, scratch_operands = 1 : i64, tpu.core_type = #tpu.core_type<tc>, window_params = [{transform_indices = @transform_0, window_bounds = array<i64: 1, 2, 128, 128>}, {pipeline_mode = #tpu.pipeline_mode<synchronous>, transform_indices = @transform_1, window_bounds = array<i64: 2, 1, 128>}, {pipeline_mode = #tpu.pipeline_mode<synchronous>, transform_indices = @transform_2, window_bounds = array<i64: 2, 1, 128>}, {pipeline_mode = #tpu.pipeline_mode<synchronous>, transform_indices = @transform_3, window_bounds = array<i64: 128, 32>}, {pipeline_mode = #tpu.pipeline_mode<synchronous>, transform_indices = @transform_4, window_bounds = array<i64: 1, 32>}, {pipeline_mode = #tpu.pipeline_mode<synchronous>, transform_indices = @transform_5, window_bounds = array<i64: 32, 256>}, {pipeline_mode = #tpu.pipeline_mode<synchronous>, transform_indices = @transform_6, window_bounds = array<i64: 1, 256>}, {transform_indices = @transform_7, window_bounds = array<i64: 1, 1, 256>}]} {
    %c0_i32 = arith.constant 0 : i32
    %0 = arith.cmpi eq, %arg1, %c0_i32 : i32
    %1 = arith.extui %0 : i1 to i32
    %c0_i32_0 = arith.constant 0 : i32
    %2 = arith.cmpi ne, %1, %c0_i32_0 : i32
    scf.if %2 {
      %cst_28 = arith.constant 0.000000e+00 : f32
      %40 = vector.broadcast %cst_28 : f32 to vector<1x128xf32>
      %c0_29 = arith.constant 0 : index
      %c0_30 = arith.constant 0 : index
      %41 = vector.load %arg10[%c0_29, %c0_30] : memref<1x128xf32, #tpu.memory_space<vmem>>, vector<1x128xf32>
      tpu.vector_store %arg10[%c0_29, %c0_30], %40 {strides = array<i32>} : memref<1x128xf32, #tpu.memory_space<vmem>>, vector<1x128xf32>,
    } else {
    }
    %cst = arith.constant 0.000000e+00 : f32
    %3 = vector.broadcast %cst : f32 to vector<1x128xf32>
    %c0 = arith.constant 0 : index
    %c0_1 = arith.constant 0 : index
    %c0_2 = arith.constant 0 : index
    %c0_3 = arith.constant 0 : index
    %4 = vector.load %arg2[%c0, %c0_1, %c0_2, %c0_3] : memref<1x2x128x128xf32, #tpu.memory_space<vmem>>, vector<1x1x128x128xf32>
    %5 = vector.shape_cast %4 : vector<1x1x128x128xf32> to vector<128x128xf32>
    %c0_4 = arith.constant 0 : index
    %c0_5 = arith.constant 0 : index
    %c0_6 = arith.constant 0 : index
    %6 = vector.load %arg3[%c0_4, %c0_5, %c0_6] : memref<2x1x128xf32, #tpu.memory_space<vmem>>, vector<1x1x128xf32>
    %7 = vector.shape_cast %6 : vector<1x1x128xf32> to vector<1x128xf32>
    %8 = vector.broadcast %7 : vector<1x128xf32> to vector<128x128xf32>
    %9 = arith.mulf %5, %8 : vector<128x128xf32>
    %c0_7 = arith.constant 0 : index
    %c0_8 = arith.constant 0 : index
    %c0_9 = arith.constant 0 : index
    %10 = vector.load %arg4[%c0_7, %c0_8, %c0_9] : memref<2x1x128xf32, #tpu.memory_space<vmem>>, vector<1x1x128xf32>
    %11 = vector.shape_cast %10 : vector<1x1x128xf32> to vector<1x128xf32>
    %12 = vector.broadcast %11 : vector<1x128xf32> to vector<128x128xf32>
    %13 = arith.addf %9, %12 : vector<128x128xf32>
    %cst_10 = arith.constant 0.000000e+00 : f32
    %14 = vector.broadcast %cst_10 : f32 to vector<128x128xf32>
    %15 = arith.maximumf %13, %14 : vector<128x128xf32>
    %cst_11 = arith.constant dense<0.000000e+00> : vector<128xf32>
    %16 = vector.multi_reduction <add>, %15, %cst_11 [0] : vector<128x128xf32> to vector<128xf32>
    %17 = vector.shape_cast %16 : vector<128xf32> to vector<1x128xf32>
    %18 = arith.addf %3, %17 : vector<1x128xf32>
    %c0_12 = arith.constant 0 : index
    %c1 = arith.constant 1 : index
    %c0_13 = arith.constant 0 : index
    %c0_14 = arith.constant 0 : index
    %19 = vector.load %arg2[%c0_12, %c1, %c0_13, %c0_14] : memref<1x2x128x128xf32, #tpu.memory_space<vmem>>, vector<1x1x128x128xf32>
    %20 = vector.shape_cast %19 : vector<1x1x128x128xf32> to vector<128x128xf32>
    %c1_15 = arith.constant 1 : index
    %c0_16 = arith.constant 0 : index
    %c0_17 = arith.constant 0 : index
    %21 = vector.load %arg3[%c1_15, %c0_16, %c0_17] : memref<2x1x128xf32, #tpu.memory_space<vmem>>, vector<1x1x128xf32>
    %22 = vector.shape_cast %21 : vector<1x1x128xf32> to vector<1x128xf32>
    %23 = vector.broadcast %22 : vector<1x128xf32> to vector<128x128xf32>
    %24 = arith.mulf %20, %23 : vector<128x128xf32>
    %c1_18 = arith.constant 1 : index
    %c0_19 = arith.constant 0 : index
    %c0_20 = arith.constant 0 : index
    %25 = vector.load %arg4[%c1_18, %c0_19, %c0_20] : memref<2x1x128xf32, #tpu.memory_space<vmem>>, vector<1x1x128xf32>
    %26 = vector.shape_cast %25 : vector<1x1x128xf32> to vector<1x128xf32>
    %27 = vector.broadcast %26 : vector<1x128xf32> to vector<128x128xf32>
    %28 = arith.addf %24, %27 : vector<128x128xf32>
    %cst_21 = arith.constant 0.000000e+00 : f32
    %29 = vector.broadcast %cst_21 : f32 to vector<128x128xf32>
    %30 = arith.maximumf %28, %29 : vector<128x128xf32>
    %cst_22 = arith.constant dense<0.000000e+00> : vector<128xf32>
    %31 = vector.multi_reduction <add>, %30, %cst_22 [0] : vector<128x128xf32> to vector<128xf32>
    %32 = vector.shape_cast %31 : vector<128xf32> to vector<1x128xf32>
    %33 = arith.addf %18, %32 : vector<1x128xf32>
    %c0_23 = arith.constant 0 : index
    %c0_24 = arith.constant 0 : index
    %34 = vector.load %arg10[%c0_23, %c0_24] : memref<1x128xf32, #tpu.memory_space<vmem>>, vector<1x128xf32>
    %35 = arith.addf %34, %33 : vector<1x128xf32>
    %c0_25 = arith.constant 0 : index
    %c0_26 = arith.constant 0 : index
    %36 = vector.load %arg10[%c0_25, %c0_26] : memref<1x128xf32, #tpu.memory_space<vmem>>, vector<1x128xf32>
    tpu.vector_store %arg10[%c0_25, %c0_26], %35 {strides = array<i32>} : memref<1x128xf32, #tpu.memory_space<vmem>>, vector<1x128xf32>,
    %c1_i32 = arith.constant 1 : i32
    %37 = arith.cmpi eq, %arg1, %c1_i32 : i32
    %38 = arith.extui %37 : i1 to i32
    %c0_i32_27 = arith.constant 0 : i32
    %39 = arith.cmpi ne, %38, %c0_i32_27 : i32
    scf.if %39 {
      %c0_28 = arith.constant 0 : index
      %c0_29 = arith.constant 0 : index
      %40 = vector.load %arg10[%c0_28, %c0_29] : memref<1x128xf32, #tpu.memory_space<vmem>>, vector<1x128xf32>
      %cst_30 = arith.constant 3.906250e-03 : f32
      %41 = vector.broadcast %cst_30 : f32 to vector<1x128xf32>
      %42 = arith.mulf %40, %41 : vector<1x128xf32>
      %c0_31 = arith.constant 0 : index
      %c0_32 = arith.constant 0 : index
      %43 = vector.load %arg5[%c0_31, %c0_32] : memref<128x32xf32, #tpu.memory_space<vmem>>, vector<128x32xf32>
      %cst_33 = arith.constant dense<0.000000e+00> : vector<1x32xf32>
      %44 = tpu.matmul %42, %43, %cst_33 {dimension_numbers = #tpu.dot_dimension_numbers<[1], [0], [0], [1], [0, 0, 1, 1], [], []>} : vector<1x128xf32>, vector<128x32xf32>, vector<1x32xf32> -> vector<1x32xf32>
      %c0_34 = arith.constant 0 : index
      %c0_35 = arith.constant 0 : index
      %45 = vector.load %arg6[%c0_34, %c0_35] : memref<1x32xf32, #tpu.memory_space<vmem>>, vector<1x32xf32>
      %46 = arith.addf %44, %45 : vector<1x32xf32>
      %c0_36 = arith.constant 0 : index
      %c0_37 = arith.constant 0 : index
      %47 = vector.load %arg7[%c0_36, %c0_37] : memref<32x256xf32, #tpu.memory_space<vmem>>, vector<32x256xf32>
      %cst_38 = arith.constant dense<0.000000e+00> : vector<1x256xf32>
      %48 = tpu.matmul %46, %47, %cst_38 {dimension_numbers = #tpu.dot_dimension_numbers<[1], [0], [0], [1], [0, 0, 1, 1], [], []>} : vector<1x32xf32>, vector<32x256xf32>, vector<1x256xf32> -> vector<1x256xf32>
      %c0_39 = arith.constant 0 : index
      %c0_40 = arith.constant 0 : index
      %49 = vector.load %arg8[%c0_39, %c0_40] : memref<1x256xf32, #tpu.memory_space<vmem>>, vector<1x256xf32>
      %50 = arith.addf %48, %49 : vector<1x256xf32>
      %51 = vector.extract_strided_slice %50 {offsets = [0, 0], sizes = [1, 128], strides = [1, 1]} : vector<1x256xf32> to vector<1x128xf32>
      %52 = vector.extract_strided_slice %50 {offsets = [0, 128], sizes = [1, 128], strides = [1, 1]} : vector<1x256xf32> to vector<1x128xf32>
      %53 = arith.maximumf %51, %52 : vector<1x128xf32>
      %54 = tpu.concatenate %53, %53 in 1 : vector<1x128xf32>, vector<1x128xf32> -> vector<1x256xf32>
      %55 = arith.subf %50, %54 : vector<1x256xf32>
      %56 = math.exp %55 : vector<1x256xf32>
      %57 = vector.extract_strided_slice %56 {offsets = [0, 0], sizes = [1, 128], strides = [1, 1]} : vector<1x256xf32> to vector<1x128xf32>
      %58 = vector.extract_strided_slice %56 {offsets = [0, 128], sizes = [1, 128], strides = [1, 1]} : vector<1x256xf32> to vector<1x128xf32>
      %59 = arith.addf %57, %58 : vector<1x128xf32>
      %cst_41 = arith.constant 1.000000e+00 : f32
      %60 = vector.broadcast %cst_41 : f32 to vector<1x128xf32>
      %61 = arith.divf %60, %59 : vector<1x128xf32>
      %62 = tpu.concatenate %61, %61 in 1 : vector<1x128xf32>, vector<1x128xf32> -> vector<1x256xf32>
      %63 = arith.mulf %56, %62 : vector<1x256xf32>
      %c0_42 = arith.constant 0 : index
      %c0_43 = arith.constant 0 : index
      %c0_44 = arith.constant 0 : index
      %64 = vector.load %arg9[%c0_42, %c0_43, %c0_44] : memref<1x1x256xf32, #tpu.memory_space<vmem>>, vector<1x1x256xf32>
      %65 = vector.shape_cast %64 : vector<1x1x256xf32> to vector<1x256xf32>
      %66 = vector.shape_cast %63 : vector<1x256xf32> to vector<1x1x256xf32>
      tpu.vector_store %arg9[%c0_42, %c0_43, %c0_44], %66 {strides = array<i32>} : memref<1x1x256xf32, #tpu.memory_space<vmem>>, vector<1x1x256xf32>,
    } else {
    }
    return
  }
  func.func @transform_0(%arg0: i32, %arg1: i32) -> (i32, i32, i32, i32) {
    %c0_i32 = arith.constant 0 : i32
    %c0_i32_0 = arith.constant 0 : i32
    %c0_i32_1 = arith.constant 0 : i32
    return %arg0, %c0_i32, %arg1, %c0_i32_0 : i32, i32, i32, i32
  }
  func.func @transform_1(%arg0: i32, %arg1: i32) -> (i32, i32, i32) {
    %c0_i32 = arith.constant 0 : i32
    %c0_i32_0 = arith.constant 0 : i32
    %c0_i32_1 = arith.constant 0 : i32
    %c0_i32_2 = arith.constant 0 : i32
    return %c0_i32, %c0_i32_0, %c0_i32_1 : i32, i32, i32
  }
  func.func @transform_2(%arg0: i32, %arg1: i32) -> (i32, i32, i32) {
    %c0_i32 = arith.constant 0 : i32
    %c0_i32_0 = arith.constant 0 : i32
    %c0_i32_1 = arith.constant 0 : i32
    %c0_i32_2 = arith.constant 0 : i32
    return %c0_i32, %c0_i32_0, %c0_i32_1 : i32, i32, i32
  }
  func.func @transform_3(%arg0: i32, %arg1: i32) -> (i32, i32) {
    %c0_i32 = arith.constant 0 : i32
    %c0_i32_0 = arith.constant 0 : i32
    %c0_i32_1 = arith.constant 0 : i32
    return %c0_i32, %c0_i32_0 : i32, i32
  }
  func.func @transform_4(%arg0: i32, %arg1: i32) -> (i32, i32) {
    %c0_i32 = arith.constant 0 : i32
    %c0_i32_0 = arith.constant 0 : i32
    %c0_i32_1 = arith.constant 0 : i32
    return %c0_i32, %c0_i32_0 : i32, i32
  }
  func.func @transform_5(%arg0: i32, %arg1: i32) -> (i32, i32) {
    %c0_i32 = arith.constant 0 : i32
    %c0_i32_0 = arith.constant 0 : i32
    %c0_i32_1 = arith.constant 0 : i32
    return %c0_i32, %c0_i32_0 : i32, i32
  }
  func.func @transform_6(%arg0: i32, %arg1: i32) -> (i32, i32) {
    %c0_i32 = arith.constant 0 : i32
    %c0_i32_0 = arith.constant 0 : i32
    %c0_i32_1 = arith.constant 0 : i32
    return %c0_i32, %c0_i32_0 : i32, i32
  }
  func.func @transform_7(%arg0: i32, %arg1: i32) -> (i32, i32, i32) {
    %c0_i32 = arith.constant 0 : i32
    %c0_i32_0 = arith.constant 0 : i32
    %c0_i32_1 = arith.constant 0 : i32
    return %arg0, %c0_i32, %c0_i32_0 : i32, i32, i32
  }
}

</mosaic_0001>

<llo_original>
// kernel: tpu_custom_call.1
$region0: #{tpu_custom_call.1}
  #allocation0 [shape = 'u32[]', space=smem, size = 0x4, offset = 0x4, fixed_abs, tag = 'smem constant byte address 0x4 - core index']
  #allocation1 [shape = 'u32[144,128]{1,0:T(1,128)}', space=vmem, size = 0x12000, scoped, tag = 'internal scratch']
  #allocation2 [shape = 'f32[1,128]{1,0:T(1,128)}', space=vmem, size = 0x200, scoped, tag = 'scratch operand']
  #allocation7 [shape = 's32[]', space=sflag, size = 0x4, offset = 0, fixed_abs, tag = 'sflag constant byte address 0x0 - dummy sync flag']
  %s0 = inlined_call_operand.hbm [shape: f32[2,2,256,128], index: 0, kind: input, shape index: {}]
  %s1 = inlined_call_operand.vmem [shape: f32[2,1,128], index: 1, kind: input, shape index: {}]
  %s2 = inlined_call_operand.vmem [shape: f32[2,1,128], index: 2, kind: input, shape index: {}]
  %s3 = inlined_call_operand.vmem [shape: f32[128,32], index: 3, kind: input, shape index: {}]
  %s4 = inlined_call_operand.vmem [shape: f32[1,32], index: 4, kind: input, shape index: {}]
  %s5 = inlined_call_operand.vmem [shape: f32[32,256], index: 5, kind: input, shape index: {}]
  %s6 = inlined_call_operand.vmem [shape: f32[1,256], index: 6, kind: input, shape index: {}]
  %s7 = inlined_call_operand.hbm [shape: f32[2,1,256], index: 7, kind: output, shape index: {}]
  %s8 = sld [smem:[#allocation0]]
  $region73: #{tpu_custom_call.1} parent=0
    _
  %s10 = ssub.s32 1, %s8
  %s11 = scalar_select 0, %s10, %s8
  $region1: #{tpu_custom_call.1} parent=0
    #allocation3 [shape = 'u8[262144]{0}', space=vmem, size = 0x40000, scoped, tag = 'input window, operand 0']
    #allocation4 [shape = 's32[2]{0}', space=sflag, size = 0x8, scoped, tag = 'scoped memory for tpu_custom_call.1']
    #allocation5 [shape = 's32[2]{0}', space=sflag, size = 0x8, scoped, tag = 'scoped memory for tpu_custom_call.1']
    #allocation6 [shape = 'u8[2048]{0}', space=vmem, size = 0x800, scoped, tag = 'output window, operand 0']
    %12 = vsyncpa [#allocation4], 0
    %s13 = scalar_lea.sflag [#allocation4], 1
    %14 = vsyncpa %s13, 0
    %15 = vsyncpa [#allocation5], 0
    %s16 = scalar_lea.sflag [#allocation5], 1
    %17 = vsyncpa %s16, 0
    loop: start=0, step=1, limit=6
    $region2: #{tpu_custom_call.1} parent=1 // loop_pre_header
      _
    $region3: #{tpu_custom_call.1} parent=1 // loop_header
      %s19 = sphi 0, %s23
      %p20 = scmp.ge.s32.totalorder %s19, 6
      %s26 = sphi 0, %s38
      %s27 = sphi 0, %s34
      %s28 = sphi 0, %s26
      %s29 = sphi 0, %s27
      %s30 = sphi 0, %s28
      %s31 = sphi 0, %s29
      %s43 = sphi 0, %s45
      %s46 = sphi 0, %s43
      %s47 = sphi 0, %s46
      %s63 = sphi 0, %s47
      %s67 = sphi 0, %s67
      %s69 = sphi 0, %s67
      %s70 = sphi 0, %s69
      %s84 = sphi 0, %s70
      %s88 = sphi 0, %s88
      %s90 = sphi 0, %s88
      %s91 = sphi 0, %s90
      %s105 = sphi 0, %s91
      %s109 = sphi 0, %s109
      %s111 = sphi 0, %s109
      %s112 = sphi 0, %s111
      %s126 = sphi 0, %s112
      %s130 = sphi 0, %s130
      %s132 = sphi 0, %s130
      %s133 = sphi 0, %s132
      %s147 = sphi 0, %s133
      %s151 = sphi 0, %s151
      %s153 = sphi 0, %s151
      %s154 = sphi 0, %s153
      %s168 = sphi 0, %s154
      %s172 = sphi 0, %s172
      %s174 = sphi 0, %s172
      %s175 = sphi 0, %s174
      %s189 = sphi 0, %s175
      %s195 = sphi 0, %s197
      %s198 = sphi 0, %s195
      %s199 = sphi 0, %s198
      %s215 = sphi 0, %s199
    $region4: #{tpu_custom_call.1} parent=1 // loop_header_branch
      %22 = sbr.rel (%p20) target = $region8
    $region5: #{tpu_custom_call.1} parent=1 // loop_body
      %s24 = ssub.s32 %s19, 1
      %s25 = ssub.s32 %s19, 2
      %s32 = sadd.s32 1, %s27
      %p33 = scmp.ge.s32.totalorder %s32, 2
      %s34 = scalar_select %p33, 0, %s32
      %s35 = sadd.s32 1, %s26
      %s36 = scalar_select %p33, %s35, %s26
      %p37 = scmp.ge.s32.totalorder %s36, 2
      %s38 = scalar_select %p37, 0, %s36
      %s39 = ssub.s32 %s26, %s38
      %s40 = ssub.s32 %s27, %s34
      %s41 = sor.u32 %s39, %s40
      %p42 = scmp.eq.s32.totalorder %s41, 0
      %s44 = sadd.s32 %s43, 1
      %s45 = scalar_select %p42, %s43, %s44
      %p48 = pneg %p42
      %p49 = scmp.eq.s32.totalorder %s19, 3
      %p50 = por %p48, %p49
      %p51 = scmp.ne.s32.totalorder %s43, %s46
      %p52 = scmp.eq.s32.totalorder %s19, 0
      %p53 = por %p51, %p52
      %p54 = scmp.ne.s32.totalorder %s43, %s46
      %p55 = scmp.eq.s32.totalorder %s24, 3
      %p56 = por %p54, %p55
      %p57 = scmp.ne.s32.totalorder %s46, %s47
      %p58 = scmp.eq.s32.totalorder %s24, 0
      %p59 = por %p57, %p58
      %p60 = scmp.ne.s32.totalorder %s46, %s47
      %p61 = scmp.eq.s32.totalorder %s25, 3
      %p62 = por %p60, %p61
      %p64 = scmp.ne.s32.totalorder %s47, %s63
      %p65 = scmp.eq.s32.totalorder %s25, 0
      %p66 = por %p64, %p65
      %s68 = sadd.s32 %s67, 1
      %p71 = scmp.eq.s32.totalorder %s19, 3
      %p72 = scmp.ne.s32.totalorder %s67, %s69
      %p73 = scmp.eq.s32.totalorder %s19, 0
      %p74 = por %p72, %p73
      %p75 = scmp.ne.s32.totalorder %s67, %s69
      %p76 = scmp.eq.s32.totalorder %s24, 3
      %p77 = por %p75, %p76
      %p78 = scmp.ne.s32.totalorder %s69, %s70
      %p79 = scmp.eq.s32.totalorder %s24, 0
      %p80 = por %p78, %p79
      %p81 = scmp.ne.s32.totalorder %s69, %s70
      %p82 = scmp.eq.s32.totalorder %s25, 3
      %p83 = por %p81, %p82
      %p85 = scmp.ne.s32.totalorder %s70, %s84
      %p86 = scmp.eq.s32.totalorder %s25, 0
      %p87 = por %p85, %p86
      %s89 = sadd.s32 %s88, 1
      %p92 = scmp.eq.s32.totalorder %s19, 3
      %p93 = scmp.ne.s32.totalorder %s88, %s90
      %p94 = scmp.eq.s32.totalorder %s19, 0
      %p95 = por %p93, %p94
      %p96 = scmp.ne.s32.totalorder %s88, %s90
      %p97 = scmp.eq.s32.totalorder %s24, 3
      %p98 = por %p96, %p97
      %p99 = scmp.ne.s32.totalorder %s90, %s91
      %p100 = scmp.eq.s32.totalorder %s24, 0
      %p101 = por %p99, %p100
      %p102 = scmp.ne.s32.totalorder %s90, %s91
      %p103 = scmp.eq.s32.totalorder %s25, 3
      %p104 = por %p102, %p103
      %p106 = scmp.ne.s32.totalorder %s91, %s105
      %p107 = scmp.eq.s32.totalorder %s25, 0
      %p108 = por %p106, %p107
      %s110 = sadd.s32 %s109, 1
      %p113 = scmp.eq.s32.totalorder %s19, 3
      %p114 = scmp.ne.s32.totalorder %s109, %s111
      %p115 = scmp.eq.s32.totalorder %s19, 0
      %p116 = por %p114, %p115
      %p117 = scmp.ne.s32.totalorder %s109, %s111
      %p118 = scmp.eq.s32.totalorder %s24, 3
      %p119 = por %p117, %p118
      %p120 = scmp.ne.s32.totalorder %s111, %s112
      %p121 = scmp.eq.s32.totalorder %s24, 0
      %p122 = por %p120, %p121
      %p123 = scmp.ne.s32.totalorder %s111, %s112
      %p124 = scmp.eq.s32.totalorder %s25, 3
      %p125 = por %p123, %p124
      %p127 = scmp.ne.s32.totalorder %s112, %s126
      %p128 = scmp.eq.s32.totalorder %s25, 0
      %p129 = por %p127, %p128
      %s131 = sadd.s32 %s130, 1
      %p134 = scmp.eq.s32.totalorder %s19, 3
      %p135 = scmp.ne.s32.totalorder %s130, %s132
      %p136 = scmp.eq.s32.totalorder %s19, 0
      %p137 = por %p135, %p136
      %p138 = scmp.ne.s32.totalorder %s130, %s132
      %p139 = scmp.eq.s32.totalorder %s24, 3
      %p140 = por %p138, %p139
      %p141 = scmp.ne.s32.totalorder %s132, %s133
      %p142 = scmp.eq.s32.totalorder %s24, 0
      %p143 = por %p141, %p142
      %p144 = scmp.ne.s32.totalorder %s132, %s133
      %p145 = scmp.eq.s32.totalorder %s25, 3
      %p146 = por %p144, %p145
      %p148 = scmp.ne.s32.totalorder %s133, %s147
      %p149 = scmp.eq.s32.totalorder %s25, 0
      %p150 = por %p148, %p149
      %s152 = sadd.s32 %s151, 1
      %p155 = scmp.eq.s32.totalorder %s19, 3
      %p156 = scmp.ne.s32.totalorder %s151, %s153
      %p157 = scmp.eq.s32.totalorder %s19, 0
      %p158 = por %p156, %p157
      %p159 = scmp.ne.s32.totalorder %s151, %s153
      %p160 = scmp.eq.s32.totalorder %s24, 3
      %p161 = por %p159, %p160
      %p162 = scmp.ne.s32.totalorder %s153, %s154
      %p163 = scmp.eq.s32.totalorder %s24, 0
      %p164 = por %p162, %p163
      %p165 = scmp.ne.s32.totalorder %s153, %s154
      %p166 = scmp.eq.s32.totalorder %s25, 3
      %p167 = por %p165, %p166
      %p169 = scmp.ne.s32.totalorder %s154, %s168
      %p170 = scmp.eq.s32.totalorder %s25, 0
      %p171 = por %p169, %p170
      %s173 = sadd.s32 %s172, 1
      %p176 = scmp.eq.s32.totalorder %s19, 3
      %p177 = scmp.ne.s32.totalorder %s172, %s174
      %p178 = scmp.eq.s32.totalorder %s19, 0
      %p179 = por %p177, %p178
      %p180 = scmp.ne.s32.totalorder %s172, %s174
      %p181 = scmp.eq.s32.totalorder %s24, 3
      %p182 = por %p180, %p181
      %p183 = scmp.ne.s32.totalorder %s174, %s175
      %p184 = scmp.eq.s32.totalorder %s24, 0
      %p185 = por %p183, %p184
      %p186 = scmp.ne.s32.totalorder %s174, %s175
      %p187 = scmp.eq.s32.totalorder %s25, 3
      %p188 = por %p186, %p187
      %p190 = scmp.ne.s32.totalorder %s175, %s189
      %p191 = scmp.eq.s32.totalorder %s25, 0
      %p192 = por %p190, %p191
      %s193 = ssub.s32 %s26, %s38
      %p194 = scmp.eq.s32.totalorder %s193, 0
      %s196 = sadd.s32 %s195, 1
      %s197 = scalar_select %p194, %s195, %s196
      %p200 = pneg %p194
      %p201 = scmp.eq.s32.totalorder %s19, 3
      %p202 = por %p200, %p201
      %p203 = scmp.ne.s32.totalorder %s195, %s198
      %p204 = scmp.eq.s32.totalorder %s19, 0
      %p205 = por %p203, %p204
      %p206 = scmp.ne.s32.totalorder %s195, %s198
      %p207 = scmp.eq.s32.totalorder %s24, 3
      %p208 = por %p206, %p207
      %p209 = scmp.ne.s32.totalorder %s198, %s199
      %p210 = scmp.eq.s32.totalorder %s24, 0
      %p211 = por %p209, %p210
      %p212 = scmp.ne.s32.totalorder %s198, %s199
      %p213 = scmp.eq.s32.totalorder %s25, 3
      %p214 = por %p212, %p213
      %p216 = scmp.ne.s32.totalorder %s199, %s215
      %p217 = scmp.eq.s32.totalorder %s25, 0
      %p218 = por %p216, %p217
      %p219 = scmp.le.s32.totalorder 1, %s19
      %p220 = scmp.lt.s32.totalorder %s19, 5
      %p221 = pnand %p219, %p220
      %p222 = pneg %p221
      // Predicated region
      $region9: #{tpu_custom_call.1} parent=5 // pred_check
        _
      $region10: #{tpu_custom_call.1} parent=5 // pred_check_branch
        %224 = sbr.rel (%p221) target = $region12
      $region11: #{tpu_custom_call.1} parent=5 // pred_region
        %s225 = ssub.s32 %s19, 1
        // Predicated region
        $region13: #{tpu_custom_call.1} parent=11 // pred_check
          %p226 = pneg %p80
        $region14: #{tpu_custom_call.1} parent=11 // pred_check_branch
          %228 = sbr.rel (%p226) target = $region16
        $region15: #{tpu_custom_call.1} parent=11 // pred_region
          _
        $region16: #{tpu_custom_call.1} parent=11 // pred_fallthru
          _
        // Predicated region
        $region17: #{tpu_custom_call.1} parent=11 // pred_check
          %p229 = pneg %p101
        $region18: #{tpu_custom_call.1} parent=11 // pred_check_branch
          %231 = sbr.rel (%p229) target = $region20
        $region19: #{tpu_custom_call.1} parent=11 // pred_region
          _
        $region20: #{tpu_custom_call.1} parent=11 // pred_fallthru
          _
        // Predicated region
        $region21: #{tpu_custom_call.1} parent=11 // pred_check
          %p232 = pneg %p122
        $region22: #{tpu_custom_call.1} parent=11 // pred_check_branch
          %234 = sbr.rel (%p232) target = $region24
        $region23: #{tpu_custom_call.1} parent=11 // pred_region
          _
        $region24: #{tpu_custom_call.1} parent=11 // pred_fallthru
          _
        // Predicated region
        $region25: #{tpu_custom_call.1} parent=11 // pred_check
          %p235 = pneg %p143
        $region26: #{tpu_custom_call.1} parent=11 // pred_check_branch
          %237 = sbr.rel (%p235) target = $region28
        $region27: #{tpu_custom_call.1} parent=11 // pred_region
          _
        $region28: #{tpu_custom_call.1} parent=11 // pred_fallthru
          _
        // Predicated region
        $region29: #{tpu_custom_call.1} parent=11 // pred_check
          %p238 = pneg %p164
        $region30: #{tpu_custom_call.1} parent=11 // pred_check_branch
          %240 = sbr.rel (%p238) target = $region32
        $region31: #{tpu_custom_call.1} parent=11 // pred_region
          _
        $region32: #{tpu_custom_call.1} parent=11 // pred_fallthru
          _
        // Predicated region
        $region33: #{tpu_custom_call.1} parent=11 // pred_check
          %p241 = pneg %p185
        $region34: #{tpu_custom_call.1} parent=11 // pred_check_branch
          %243 = sbr.rel (%p241) target = $region36
        $region35: #{tpu_custom_call.1} parent=11 // pred_region
          _
        $region36: #{tpu_custom_call.1} parent=11 // pred_fallthru
          _
      $region12: #{tpu_custom_call.1} parent=5 // pred_fallthru
        _
      %p244 = scmp.lt.s32.totalorder %s19, 4
      // Predicated region
      $region37: #{tpu_custom_call.1} parent=5 // pred_check
        %p245 = pneg %p244
      $region38: #{tpu_custom_call.1} parent=5 // pred_check_branch
        %247 = sbr.rel (%p245) target = $region40
      $region39: #{tpu_custom_call.1} parent=5 // pred_region
        // Predicated region
        $region41: #{tpu_custom_call.1} parent=39 // pred_check
          %p248 = pneg %p53
        $region42: #{tpu_custom_call.1} parent=39 // pred_check_branch
          %250 = sbr.rel (%p248) target = $region44
        $region43: #{tpu_custom_call.1} parent=39 // pred_region
          #allocation8 [shape = 'u32[6]{0}', space=smem, size = 0x18, scoped, tag = 'DMA stride descriptor']
          %s251 = sand.u32 %s43, 1
          %s252 = scalar_lea.sflag [#allocation4], %s251
          %s253 = sand.u32 %s43, 1
          %s254 = smul.addr %s253, 256
          %s255 = scalar_lea.vmem [#allocation3], %s254
          %s256 = smul.u32 16, %s27
          %s258 = ssub.s32 4096, 4096
          %259 = vsyncadd %s252, %s258
          %s260 = smul.addr %s26, 64
          %s261 = sadd.s32 %s256, %s260
          %s262 = smul.addr %s261, 128
          %s263 = scalar_lea.hbm %s0, %s262
          %s265 = sshll.u32 1, 14
          %s266 = sxor.u32 4294967295, %s265
          %s268 = sld [smem:[#allocation0]]
          %s269 = sadd.s32 2, %s268
          %s271 = sshll.u32 7, 26
          %s272 = sxor.u32 4294967295, %s271
          %s273 = sand.u32 0, %s272
          %s274 = sshll.u32 %s269, 26
          %s275 = sor.u32 %s273, %s274
          %s276 = sshll.u32 %s255, 4
          %s277 = int_to_ptr.vmem [resolvable:$true] %s276
          %283 = sst [smem:[#allocation8]] 4096
          %s284 = scalar_lea.smem [#allocation8], 1
          %285 = sst [smem:[%s284]] 2048
          %s286 = scalar_lea.smem [#allocation8], 2
          %287 = sst [smem:[%s286]] 16
          %s288 = scalar_lea.smem [#allocation8], 3
          %289 = sst [smem:[%s288]] 128
          %s290 = scalar_lea.smem [#allocation8], 4
          %291 = sst [smem:[%s290]] 128
          %s292 = scalar_lea.smem [#allocation8], 5
          %293 = sst [smem:[%s292]] 8
          %295 = dma.general %s263, 4096, %s277, %s252, [#allocation7], [#allocation8], %s275, 0
        $region44: #{tpu_custom_call.1} parent=39 // pred_fallthru
          _
      $region40: #{tpu_custom_call.1} parent=5 // pred_fallthru
        _
      %p296 = scmp.le.s32.totalorder 1, %s19
      %p297 = scmp.lt.s32.totalorder %s19, 5
      %p298 = pnand %p296, %p297
      %p299 = pneg %p298
      // Predicated region
      $region45: #{tpu_custom_call.1} parent=5 // pred_check
        _
      $region46: #{tpu_custom_call.1} parent=5 // pred_check_branch
        %301 = sbr.rel (%p298) target = $region48
      $region47: #{tpu_custom_call.1} parent=5 // pred_region
        %s302 = ssub.s32 %s19, 1
        %s303 = sand.u32 %s46, 1
        %s304 = scalar_lea.sflag [#allocation4], %s303
        %s305 = sand.u32 %s46, 1
        %s306 = smul.addr %s305, 256
        %s307 = scalar_lea.vmem [#allocation3], %s306
        // Predicated region
        $region49: #{tpu_custom_call.1} parent=47 // pred_check
          %p308 = pneg %p59
        $region50: #{tpu_custom_call.1} parent=47 // pred_check_branch
          %310 = sbr.rel (%p308) target = $region52
        $region51: #{tpu_custom_call.1} parent=47 // pred_region
          %311 = dma.done %s304, 4096
        $region52: #{tpu_custom_call.1} parent=47 // pred_fallthru
          _
        %s312 = sand.u32 %s46, 1
        %s313 = scalar_lea.sflag [#allocation4], %s312
        %s314 = sand.u32 %s46, 1
        %s315 = smul.addr %s314, 256
        %s316 = scalar_lea.vmem [#allocation3], %s315
        %p317 = pneg %p59
        %p318 = pneg %p56
        %p319 = pneg %p80
        %p320 = pneg %p77
        %p321 = pneg %p101
        %p322 = pneg %p98
        %p323 = pneg %p122
        %p324 = pneg %p119
        %p325 = pneg %p143
        %p326 = pneg %p140
        %p327 = pneg %p164
        %p328 = pneg %p161
        %p329 = pneg %p185
        %p330 = pneg %p182
        %p331 = pneg %p211
        %p332 = pneg %p208
        %s333 = sand.u32 %s198, 1
        %s334 = scalar_lea.sflag [#allocation5], %s333
        %s335 = sand.u32 %s198, 1
        %s336 = smul.addr %s335, 2
        %s337 = scalar_lea.vmem [#allocation6], %s336
        %s338 = smul.u32 16, %s29
        %p339 = scmp.eq.s32.totalorder %s29, 0
        // Predicated region
        $region53: #{tpu_custom_call.1} parent=47 // pred_check
          %p340 = pneg %p339
        $region54: #{tpu_custom_call.1} parent=47 // pred_check_branch
          %342 = sbr.rel (%p340) target = $region56
        $region55: #{tpu_custom_call.1} parent=47 // pred_region
          %343 = vst [vmem:[#allocation2] sm:$0x1] 0.0
        $region56: #{tpu_custom_call.1} parent=47 // pred_fallthru
          _
        %v344 = vld [vmem:[%s307] sm:$0xff]
        %v345 = vld [vmem:[%s307 + $0x8] sm:$0xff]
        %v346 = vld [vmem:[%s307 + $0x10] sm:$0xff]
        %v347 = vld [vmem:[%s307 + $0x18] sm:$0xff]
        %v348 = vld [vmem:[%s307 + $0x20] sm:$0xff]
        %v349 = vld [vmem:[%s307 + $0x28] sm:$0xff]
        %v350 = vld [vmem:[%s307 + $0x30] sm:$0xff]
        %v351 = vld [vmem:[%s307 + $0x38] sm:$0xff]
        %v352 = vld [vmem:[%s307 + $0x40] sm:$0xff]
        %v353 = vld [vmem:[%s307 + $0x48] sm:$0xff]
        %v354 = vld [vmem:[%s307 + $0x50] sm:$0xff]
        %v355 = vld [vmem:[%s307 + $0x58] sm:$0xff]
        %v356 = vld [vmem:[%s307 + $0x60] sm:$0xff]
        %v357 = vld [vmem:[%s307 + $0x68] sm:$0xff]
        %v358 = vld [vmem:[%s307 + $0x70] sm:$0xff]
        %v359 = vld [vmem:[%s307 + $0x78] sm:$0xff]
        %v360 = vld [vmem:[%s1] sm:$0x1]
        %v362 = vlaneseq
        %v363 = vshrl.u32 %v362, 7
        %v364 = vsub.s32 0, %v363
        %v365 = vrot.slane %v360, %v364
        %v367 = vmul.f32 %v344, %v365
        %v368 = vmul.f32 %v345, %v365
        %v369 = vmul.f32 %v346, %v365
        %v370 = vmul.f32 %v347, %v365
        %v371 = vmul.f32 %v348, %v365
        %v372 = vmul.f32 %v349, %v365
        %v373 = vmul.f32 %v350, %v365
        %v374 = vmul.f32 %v351, %v365
        %v375 = vmul.f32 %v352, %v365
        %v376 = vmul.f32 %v353, %v365
        %v377 = vmul.f32 %v354, %v365
        %v378 = vmul.f32 %v355, %v365
        %v379 = vmul.f32 %v356, %v365
        %v380 = vmul.f32 %v357, %v365
        %v381 = vmul.f32 %v358, %v365
        %v382 = vmul.f32 %v359, %v365
        %v383 = vld [vmem:[%s2] sm:$0x1]
        %v385 = vlaneseq
        %v386 = vshrl.u32 %v385, 7
        %v387 = vsub.s32 0, %v386
        %v388 = vrot.slane %v383, %v387
        %v390 = vadd.f32 %v367, %v388
        %v391 = vadd.f32 %v368, %v388
        %v392 = vadd.f32 %v369, %v388
        %v393 = vadd.f32 %v370, %v388
        %v394 = vadd.f32 %v371, %v388
        %v395 = vadd.f32 %v372, %v388
        %v396 = vadd.f32 %v373, %v388
        %v397 = vadd.f32 %v374, %v388
        %v398 = vadd.f32 %v375, %v388
        %v399 = vadd.f32 %v376, %v388
        %v400 = vadd.f32 %v377, %v388
        %v401 = vadd.f32 %v378, %v388
        %v402 = vadd.f32 %v379, %v388
        %v403 = vadd.f32 %v380, %v388
        %v404 = vadd.f32 %v381, %v388
        %v405 = vadd.f32 %v382, %v388
        %v406 = vmax.f32 %v390, 0.0
        %v407 = vmax.f32 %v391, 0.0
        %v408 = vmax.f32 %v392, 0.0
        %v409 = vmax.f32 %v393, 0.0
        %v410 = vmax.f32 %v394, 0.0
        %v411 = vmax.f32 %v395, 0.0
        %v412 = vmax.f32 %v396, 0.0
        %v413 = vmax.f32 %v397, 0.0
        %v414 = vmax.f32 %v398, 0.0
        %v415 = vmax.f32 %v399, 0.0
        %v416 = vmax.f32 %v400, 0.0
        %v417 = vmax.f32 %v401, 0.0
        %v418 = vmax.f32 %v402, 0.0
        %v419 = vmax.f32 %v403, 0.0
        %v420 = vmax.f32 %v404, 0.0
        %v421 = vmax.f32 %v405, 0.0
        %v422 = vadd.f32 %v406, %v407
        %v423 = vadd.f32 %v422, %v408
        %v424 = vadd.f32 %v423, %v409
        %v425 = vadd.f32 %v424, %v410
        %v426 = vadd.f32 %v425, %v411
        %v427 = vadd.f32 %v426, %v412
        %v428 = vadd.f32 %v427, %v413
        %v429 = vadd.f32 %v428, %v414
        %v430 = vadd.f32 %v429, %v415
        %v431 = vadd.f32 %v430, %v416
        %v432 = vadd.f32 %v431, %v417
        %v433 = vadd.f32 %v432, %v418
        %v434 = vadd.f32 %v433, %v419
        %v435 = vadd.f32 %v434, %v420
        %v436 = vadd.f32 %v435, %v421
        %v437 = vrot.slane %v436, 4
        %v438 = vadd.f32 %v436, %v437
        %v439 = vrot.slane %v438, 2
        %v440 = vadd.f32 %v438, %v439
        %v441 = vrot.slane %v440, 1
        %v442 = vadd.f32 %v440, %v441
        %v443 = vadd.f32 %v442, 0.0
        %s444 = scalar_lea.vmem %s307, 128 [#allocation3]
        %v445 = vld [vmem:[%s444] sm:$0xff]
        %v446 = vld [vmem:[%s444 + $0x8] sm:$0xff]
        %v447 = vld [vmem:[%s444 + $0x10] sm:$0xff]
        %v448 = vld [vmem:[%s444 + $0x18] sm:$0xff]
        %v449 = vld [vmem:[%s444 + $0x20] sm:$0xff]
        %v450 = vld [vmem:[%s444 + $0x28] sm:$0xff]
        %v451 = vld [vmem:[%s444 + $0x30] sm:$0xff]
        %v452 = vld [vmem:[%s444 + $0x38] sm:$0xff]
        %v453 = vld [vmem:[%s444 + $0x40] sm:$0xff]
        %v454 = vld [vmem:[%s444 + $0x48] sm:$0xff]
        %v455 = vld [vmem:[%s444 + $0x50] sm:$0xff]
        %v456 = vld [vmem:[%s444 + $0x58] sm:$0xff]
        %v457 = vld [vmem:[%s444 + $0x60] sm:$0xff]
        %v458 = vld [vmem:[%s444 + $0x68] sm:$0xff]
        %v459 = vld [vmem:[%s444 + $0x70] sm:$0xff]
        %v460 = vld [vmem:[%s444 + $0x78] sm:$0xff]
        %s461 = scalar_lea.vmem %s1, 1
        %v462 = vld [vmem:[%s461] sm:$0x1]
        %v464 = vlaneseq
        %v465 = vshrl.u32 %v464, 7
        %v466 = vsub.s32 0, %v465
        %v467 = vrot.slane %v462, %v466
        %v469 = vmul.f32 %v445, %v467
        %v470 = vmul.f32 %v446, %v467
        %v471 = vmul.f32 %v447, %v467
        %v472 = vmul.f32 %v448, %v467
        %v473 = vmul.f32 %v449, %v467
        %v474 = vmul.f32 %v450, %v467
        %v475 = vmul.f32 %v451, %v467
        %v476 = vmul.f32 %v452, %v467
        %v477 = vmul.f32 %v453, %v467
        %v478 = vmul.f32 %v454, %v467
        %v479 = vmul.f32 %v455, %v467
        %v480 = vmul.f32 %v456, %v467
        %v481 = vmul.f32 %v457, %v467
        %v482 = vmul.f32 %v458, %v467
        %v483 = vmul.f32 %v459, %v467
        %v484 = vmul.f32 %v460, %v467
        %s485 = scalar_lea.vmem %s2, 1
        %v486 = vld [vmem:[%s485] sm:$0x1]
        %v488 = vlaneseq
        %v489 = vshrl.u32 %v488, 7
        %v490 = vsub.s32 0, %v489
        %v491 = vrot.slane %v486, %v490
        %v493 = vadd.f32 %v469, %v491
        %v494 = vadd.f32 %v470, %v491
        %v495 = vadd.f32 %v471, %v491
        %v496 = vadd.f32 %v472, %v491
        %v497 = vadd.f32 %v473, %v491
        %v498 = vadd.f32 %v474, %v491
        %v499 = vadd.f32 %v475, %v491
        %v500 = vadd.f32 %v476, %v491
        %v501 = vadd.f32 %v477, %v491
        %v502 = vadd.f32 %v478, %v491
        %v503 = vadd.f32 %v479, %v491
        %v504 = vadd.f32 %v480, %v491
        %v505 = vadd.f32 %v481, %v491
        %v506 = vadd.f32 %v482, %v491
        %v507 = vadd.f32 %v483, %v491
        %v508 = vadd.f32 %v484, %v491
        %v509 = vmax.f32 %v493, 0.0
        %v510 = vmax.f32 %v494, 0.0
        %v511 = vmax.f32 %v495, 0.0
        %v512 = vmax.f32 %v496, 0.0
        %v513 = vmax.f32 %v497, 0.0
        %v514 = vmax.f32 %v498, 0.0
        %v515 = vmax.f32 %v499, 0.0
        %v516 = vmax.f32 %v500, 0.0
        %v517 = vmax.f32 %v501, 0.0
        %v518 = vmax.f32 %v502, 0.0
        %v519 = vmax.f32 %v503, 0.0
        %v520 = vmax.f32 %v504, 0.0
        %v521 = vmax.f32 %v505, 0.0
        %v522 = vmax.f32 %v506, 0.0
        %v523 = vmax.f32 %v507, 0.0
        %v524 = vmax.f32 %v508, 0.0
        %v525 = vadd.f32 %v509, %v510
        %v526 = vadd.f32 %v525, %v511
        %v527 = vadd.f32 %v526, %v512
        %v528 = vadd.f32 %v527, %v513
        %v529 = vadd.f32 %v528, %v514
        %v530 = vadd.f32 %v529, %v515
        %v531 = vadd.f32 %v530, %v516
        %v532 = vadd.f32 %v531, %v517
        %v533 = vadd.f32 %v532, %v518
        %v534 = vadd.f32 %v533, %v519
        %v535 = vadd.f32 %v534, %v520
        %v536 = vadd.f32 %v535, %v521
        %v537 = vadd.f32 %v536, %v522
        %v538 = vadd.f32 %v537, %v523
        %v539 = vadd.f32 %v538, %v524
        %v540 = vrot.slane %v539, 4
        %v541 = vadd.f32 %v539, %v540
        %v542 = vrot.slane %v541, 2
        %v543 = vadd.f32 %v541, %v542
        %v544 = vrot.slane %v543, 1
        %v545 = vadd.f32 %v543, %v544
        %v546 = vadd.f32 %v443, %v545
        %v547 = vld [vmem:[#allocation2] sm:$0x1]
        %v548 = vadd.f32 %v547, %v546
        %549 = vst [vmem:[#allocation2] sm:$0x1] %v548
        %p550 = scmp.eq.s32.totalorder %s29, 1
        // Predicated region
        $region57: #{tpu_custom_call.1} parent=47 // pred_check
          %p551 = pneg %p550
        $region58: #{tpu_custom_call.1} parent=47 // pred_check_branch
          %553 = sbr.rel (%p551) target = $region60
        $region59: #{tpu_custom_call.1} parent=47 // pred_region
          %v554 = vld [vmem:[#allocation2] sm:$0x1]
          %v555 = vmul.f32 %v554, 0.00390625
          %v556 = vld [vmem:[%s3] sm:$0xff]
          %v557 = vld [vmem:[%s3 + $0x8] sm:$0xff]
          %v558 = vld [vmem:[%s3 + $0x10] sm:$0xff]
          %v559 = vld [vmem:[%s3 + $0x18] sm:$0xff]
          %v560 = vld [vmem:[%s3 + $0x20] sm:$0xff]
          %v561 = vld [vmem:[%s3 + $0x28] sm:$0xff]
          %v562 = vld [vmem:[%s3 + $0x30] sm:$0xff]
          %v563 = vld [vmem:[%s3 + $0x38] sm:$0xff]
          %v564 = vld [vmem:[%s3 + $0x40] sm:$0xff]
          %v565 = vld [vmem:[%s3 + $0x48] sm:$0xff]
          %v566 = vld [vmem:[%s3 + $0x50] sm:$0xff]
          %v567 = vld [vmem:[%s3 + $0x58] sm:$0xff]
          %v568 = vld [vmem:[%s3 + $0x60] sm:$0xff]
          %v569 = vld [vmem:[%s3 + $0x68] sm:$0xff]
          %v570 = vld [vmem:[%s3 + $0x70] sm:$0xff]
          %v571 = vld [vmem:[%s3 + $0x78] sm:$0xff]
          %v572 = vld [vmem:[%s4] sm:$0x1]
          %573 = vmatprep.subr.mxu0 0.0
          %574 = vmatpush1.msra.mxu0 %v556
          %575 = vmatprep.subr.mxu0 0.0
          %576 = vmatpush1.msra.mxu0 %v557
          %577 = vmatprep.subr.mxu0 0.0
          %578 = vmatpush1.msra.mxu0 %v558
          %579 = vmatprep.subr.mxu0 0.0
          %580 = vmatpush1.msra.mxu0 %v559
          %581 = vmatprep.subr.mxu0 0.0
          %582 = vmatpush1.msra.mxu0 %v560
          %583 = vmatprep.subr.mxu0 0.0
          %584 = vmatpush1.msra.mxu0 %v561
          %585 = vmatprep.subr.mxu0 0.0
          %586 = vmatpush1.msra.mxu0 %v562
          %587 = vmatprep.subr.mxu0 0.0
          %588 = vmatpush1.msra.mxu0 %v563
          %589 = vmatprep.subr.mxu0 0.0
          %590 = vmatpush1.msra.mxu0 %v564
          %591 = vmatprep.subr.mxu0 0.0
          %592 = vmatpush1.msra.mxu0 %v565
          %593 = vmatprep.subr.mxu0 0.0
          %594 = vmatpush1.msra.mxu0 %v566
          %595 = vmatprep.subr.mxu0 0.0
          %596 = vmatpush1.msra.mxu0 %v567
          %597 = vmatprep.subr.mxu0 0.0
          %598 = vmatpush1.msra.mxu0 %v568
          %599 = vmatprep.subr.mxu0 0.0
          %600 = vmatpush1.msra.mxu0 %v569
          %601 = vmatprep.subr.mxu0 0.0
          %602 = vmatpush1.msra.mxu0 %v570
          %603 = vmatprep.subr.mxu0 0.0
          %604 = vmatpush1.msra.mxu0 %v571
          %605 = vmatprep.subr.mxu0 0.0
          %606 = vmatpush1.msra.mxu0 0.0
          %607 = vmatprep.subr.mxu0 0.0
          %608 = vmatpush1.msra.mxu0 0.0
          %609 = vmatprep.subr.mxu0 0.0
          %610 = vmatpush1.msra.mxu0 0.0
          %611 = vmatprep.subr.mxu0 0.0
          %612 = vmatpush1.msra.mxu0 0.0
          %613 = vmatprep.subr.mxu0 0.0
          %614 = vmatpush1.msra.mxu0 0.0
          %615 = vmatprep.subr.mxu0 0.0
          %616 = vmatpush1.msra.mxu0 0.0
          %617 = vmatprep.subr.mxu0 0.0
          %618 = vmatpush1.msra.mxu0 0.0
          %619 = vmatprep.subr.mxu0 0.0
          %620 = vmatpush1.msra.mxu0 0.0
          %621 = vmatprep.subr.mxu0 0.0
          %622 = vmatpush1.msra.mxu0 0.0
          %623 = vmatprep.subr.mxu0 0.0
          %624 = vmatpush1.msra.mxu0 0.0
          %625 = vmatprep.subr.mxu0 0.0
          %626 = vmatpush1.msra.mxu0 0.0
          %627 = vmatprep.subr.mxu0 0.0
          %628 = vmatpush1.msra.mxu0 0.0
          %629 = vmatprep.subr.mxu0 0.0
          %630 = vmatpush1.msra.mxu0 0.0
          %631 = vmatprep.subr.mxu0 0.0
          %632 = vmatpush1.msra.mxu0 0.0
          %633 = vmatprep.subr.mxu0 0.0
          %634 = vmatpush1.msra.mxu0 0.0
          %635 = vmatprep.subr.mxu0 0.0
          %636 = vmatpush1.msra.mxu0 0.0
          %637 = vmatprep.mubr.f32.mxu0 0.0
          %638 = vmatmul.mubr.f32.gmra.mrb[0].mxu0 %v555
          %v639 = vpop.f32.mrb[0].mxu0
          %v640 = vadd.f32 %v572, %v639
          %v641 = vpop.f32.mrb[0].mxu0
          %642 = vdwg.mxu0
          %v643 = vld [vmem:[%s5] sm:$0xff]
          %v644 = vld [vmem:[%s5 + $0x8] sm:$0xff]
          %v645 = vld [vmem:[%s5 + $0x10] sm:$0xff]
          %v646 = vld [vmem:[%s5 + $0x18] sm:$0xff]
          %v647 = vld [vmem:[%s5 + $0x20] sm:$0xff]
          %v648 = vld [vmem:[%s5 + $0x28] sm:$0xff]
          %v649 = vld [vmem:[%s5 + $0x30] sm:$0xff]
          %v650 = vld [vmem:[%s5 + $0x38] sm:$0xff]
          %v651 = vld [vmem:[%s6] sm:$0x3]
          %v653 = vlaneseq
          %v654 = vshrl.u32 %v653, 7
          %v655 = vsub.s32 0, %v654
          %v656 = vrot.slane %v651, %v655
          %v657 = vlaneseq
          %v658 = vshrl.u32 %v657, 7
          %v659 = vsub.s32 1, %v658
          %v660 = vrot.slane %v651, %v659
          %vm663 = vcmask 261120
          %v665 = vsel %vm663, %v640, 0
          %667 = vmatprep.subr.mxu0 %v644
          %668 = vmatpush1.msra.mxu0 %v643
          %669 = vmatprep.subr.mxu0 %v646
          %670 = vmatpush1.msra.mxu0 %v645
          %671 = vmatprep.subr.mxu0 %v648
          %672 = vmatpush1.msra.mxu0 %v647
          %673 = vmatprep.subr.mxu0 %v650
          %674 = vmatpush1.msra.mxu0 %v649
          %675 = vmatprep.subr.mxu0 0.0
          %676 = vmatpush1.msra.mxu0 0.0
          %677 = vmatprep.subr.mxu0 0.0
          %678 = vmatpush1.msra.mxu0 0.0
          %679 = vmatprep.subr.mxu0 0.0
          %680 = vmatpush1.msra.mxu0 0.0
          %681 = vmatprep.subr.mxu0 0.0
          %682 = vmatpush1.msra.mxu0 0.0
          %683 = vmatprep.subr.mxu0 0.0
          %684 = vmatpush1.msra.mxu0 0.0
          %685 = vmatprep.subr.mxu0 0.0
          %686 = vmatpush1.msra.mxu0 0.0
          %687 = vmatprep.subr.mxu0 0.0
          %688 = vmatpush1.msra.mxu0 0.0
          %689 = vmatprep.subr.mxu0 0.0
          %690 = vmatpush1.msra.mxu0 0.0
          %691 = vmatprep.subr.mxu0 0.0
          %692 = vmatpush1.msra.mxu0 0.0
          %693 = vmatprep.subr.mxu0 0.0
          %694 = vmatpush1.msra.mxu0 0.0
          %695 = vmatprep.subr.mxu0 0.0
          %696 = vmatpush1.msra.mxu0 0.0
          %697 = vmatprep.subr.mxu0 0.0
          %698 = vmatpush1.msra.mxu0 0.0
          %699 = vmatprep.subr.mxu0 0.0
          %700 = vmatpush1.msra.mxu0 0.0
          %701 = vmatprep.subr.mxu0 0.0
          %702 = vmatpush1.msra.mxu0 0.0
          %703 = vmatprep.subr.mxu0 0.0
          %704 = vmatpush1.msra.mxu0 0.0
          %705 = vmatprep.subr.mxu0 0.0
          %706 = vmatpush1.msra.mxu0 0.0
          %707 = vmatprep.subr.mxu0 0.0
          %708 = vmatpush1.msra.mxu0 0.0
          %709 = vmatprep.subr.mxu0 0.0
          %710 = vmatpush1.msra.mxu0 0.0
          %711 = vmatprep.subr.mxu0 0.0
          %712 = vmatpush1.msra.mxu0 0.0
          %713 = vmatprep.subr.mxu0 0.0
          %714 = vmatpush1.msra.mxu0 0.0
          %715 = vmatprep.subr.mxu0 0.0
          %716 = vmatpush1.msra.mxu0 0.0
          %717 = vmatprep.subr.mxu0 0.0
          %718 = vmatpush1.msra.mxu0 0.0
          %719 = vmatprep.subr.mxu0 0.0
          %720 = vmatpush1.msra.mxu0 0.0
          %721 = vmatprep.subr.mxu0 0.0
          %722 = vmatpush1.msra.mxu0 0.0
          %723 = vmatprep.subr.mxu0 0.0
          %724 = vmatpush1.msra.mxu0 0.0
          %725 = vmatprep.subr.mxu0 0.0
          %726 = vmatpush1.msra.mxu0 0.0
          %727 = vmatprep.subr.mxu0 0.0
          %728 = vmatpush1.msra.mxu0 0.0
          %729 = vmatprep.subr.mxu0 0.0
          %730 = vmatpush1.msra.mxu0 0.0
          %731 = vmatprep.mubr.f32.mxu0 0.0
          %732 = vmatmul.mubr.f32.gmra.mrb[0].mxu0 %v665
          %v733 = vpop.f32.mrb[0].mxu0
          %v734 = vadd.f32 %v656, %v733
          %v735 = vpop.f32.mrb[0].mxu0
          %v736 = vadd.f32 %v660, %v735
          %737 = vdwg.mxu0
          %v738 = vmax.f32 %v734, %v736
          %v739 = vsub.f32 %v734, %v738
          %v740 = vsub.f32 %v736, %v738
          %v741 = vmul.f32 %v739, 1.442695
          %v742 = vpow.pop %v741
          %v743 = vmul.f32 %v740, 1.442695
          %v744 = vpow.pop %v743
          %v745 = vadd.f32 %v742, %v744
          %v746 = vrcp.pop %v745
          %v747 = vmul.f32 1.0, %v746
          %v748 = vmul.f32 %v742, %v747
          %v749 = vmul.f32 %v744, %v747
          %v752 = vcombine.low %v748, %v749
          %v754 = vunpack.c.l.s4 1966171168
          %v755 = vunpack.c.0.s8 %v754
          %v756 = vlaneseq
          %v757 = vshrl.u32 %v756, 7
          %v758 = vsub.s32 %v755, %v757
          %v759 = vrot.slane %v752, %v758
          %v761 = vunpack.c.l.s4 1966171168
          %v762 = vunpack.c.0.s8 %v761
          %v763 = vlaneseq
          %v764 = vshrl.u32 %v763, 7
          %v765 = vsub.s32 %v762, %v764
          %v766 = vrot.slane %v759, %v765
          %v768 = vlaneseq
          %vm769 = vcmp.ge.s32.totalorder %v768, 0
          %vm770 = vcmp.lt.s32.totalorder %v768, 256
          %vm771 = vmand %vm769, %vm770
          %772 = vst.msk [vmem:[%s337] sm:$0x3] %vm771, %v766
        $region60: #{tpu_custom_call.1} parent=47 // pred_fallthru
          _
        %s773 = sand.u32 %s198, 1
        %s774 = scalar_lea.sflag [#allocation5], %s773
        %s775 = sand.u32 %s198, 1
        %s776 = smul.addr %s775, 2
        %s777 = scalar_lea.vmem [#allocation6], %s776
        // Predicated region
        $region61: #{tpu_custom_call.1} parent=47 // pred_check
          %p778 = pneg %p208
        $region62: #{tpu_custom_call.1} parent=47 // pred_check_branch
          %780 = sbr.rel (%p778) target = $region64
        $region63: #{tpu_custom_call.1} parent=47 // pred_region
          %s782 = ssub.s32 32, 32
          %783 = vsyncadd %s774, %s782
          %s784 = smul.addr %s28, 2
          %s785 = smul.addr %s784, 16
          %s786 = scalar_lea.hbm %s7, %s785
          %s788 = sshll.u32 %s777, 4
          %s789 = int_to_ptr.vmem [resolvable:$true] %s788
          %791 = dma.vmem_to_hbm [thread:$0]  %s789, 32, %s786, %s774
        $region64: #{tpu_custom_call.1} parent=47 // pred_fallthru
          _
      $region48: #{tpu_custom_call.1} parent=5 // pred_fallthru
        _
      %p792 = scmp.le.s32.totalorder 2, %s19
      // Predicated region
      $region65: #{tpu_custom_call.1} parent=5 // pred_check
        %p793 = pneg %p792
      $region66: #{tpu_custom_call.1} parent=5 // pred_check_branch
        %795 = sbr.rel (%p793) target = $region68
      $region67: #{tpu_custom_call.1} parent=5 // pred_region
        %s796 = ssub.s32 %s19, 2
        // Predicated region
        $region69: #{tpu_custom_call.1} parent=67 // pred_check
          %p797 = pneg %p214
        $region70: #{tpu_custom_call.1} parent=67 // pred_check_branch
          %799 = sbr.rel (%p797) target = $region72
        $region71: #{tpu_custom_call.1} parent=67 // pred_region
          %s800 = sand.u32 %s199, 1
          %s801 = scalar_lea.sflag [#allocation5], %s800
          %s802 = sand.u32 %s199, 1
          %s803 = smul.addr %s802, 2
          %s804 = scalar_lea.vmem [#allocation6], %s803
          %805 = dma.done %s801, 32
        $region72: #{tpu_custom_call.1} parent=67 // pred_fallthru
          _
      $region68: #{tpu_custom_call.1} parent=5 // pred_fallthru
        _
    $region6: #{tpu_custom_call.1} parent=1 // loop_footer
      %s23 = sadd.s32 1, %s19
    $region7: #{tpu_custom_call.1} parent=1 // loop_footer_branch
      %18 = sbr.rel target = $region3
    $region8: #{tpu_custom_call.1} parent=1 // loop_exit
      _
    %806 = vsyncpa [#allocation4], 1
    %s807 = scalar_lea.sflag [#allocation4], 1
    %808 = vsyncpa %s807, 1
    %809 = vsyncpa [#allocation5], 1
    %s810 = scalar_lea.sflag [#allocation5], 1
    %811 = vsyncpa %s810, 1

</llo_original>
